<compile_context>
chip_gen: v5e
topology: v5e:2x2
jax: 0.10.0
libtpu: 0.0.40
codegen_flags: <defaults>
</compile_context>

<pallas_src>
import functools
import math

import jax
import jax.numpy as jnp
import numpy as np
from jax import lax
from jax.experimental import pallas as pl
from jax.experimental.pallas import tpu as pltpu


def mha_linformer_kernel(x_ref, wqkv_ref, ew_ref, eb_ref, fw_ref, fb_ref,
                         kmask_ref, vmask_ref, smask_ref, wo_ref, bo_ref,
                         o_ref, *, nhead, head_dim, dim_k, bblk, seq_len, mm_dtype):
    """One grid step: `bblk` batch elements, sequences folded into the sublane axis."""
    f32 = jnp.float32
    H, d, k = nhead, head_dim, dim_k
    Hd, Hk = H * d, H * k
    Np = seq_len
    c_out = o_ref.shape[-1]

    # ---- hoisted, grid-step-invariant loads / broadcasts (once per step) ----------
    wqkv = wqkv_ref[...]                                   # (C, 3*Hd)   mm_dtype
    ew = ew_ref[...]                                       # (Np, Hk)    mm, tiled + 1/sqrt(d)
    fw = fw_ref[...]                                       # (Np, Hk)    mm, tiled
    kmask = kmask_ref[...]                                 # (Hd, Hk)    mm, block-diag 0/1
    vmask = vmask_ref[...]                                 # (Hk, Hd)    mm, block-diag 0/1
    smask = smask_ref[...]                                 # (Hk, Hk)    mm, same-head 0/1
    wo = wo_ref[...]                                       # (Hd, c_out) mm, lane-padded
    eb_rows = jnp.broadcast_to(eb_ref[...], (Hd, Hk)).astype(f32)   # pre-scaled bias
    fb_cols = jnp.broadcast_to(fb_ref[...], (Hk, Hd)).astype(f32)
    bo_rows = jnp.broadcast_to(bo_ref[...], (Np, c_out)).astype(f32)

    # ---- fused Q/K/V projection for the whole batch block (big MXU M-dim) ---------
    # Output requested directly in mm_dtype: f32 MXU accumulation, single rounding,
    # and the (bblk*Np, 3Hd) intermediate stays bf16 (matters for v7x's 64 MiB VMEM).
    qkv = jnp.dot(x_ref[...], wqkv, preferred_element_type=mm_dtype)   # (bblk*Np, 3Hd)

    # bblk is kept small by construction (the grid does the batch pipelining), so a
    # static loop with static slices is fine: each iteration's live set is just the
    # qkv slab plus a handful of (Np, Hk)/(Hd, Hk)-sized temporaries.
    for b in range(bblk):
        r0 = b * Np
        qb = qkv[r0:r0 + Np, 0:Hd]                         # (Np, Hd)
        kb = qkv[r0:r0 + Np, Hd:2 * Hd]                    # (Np, Hd)
        vb = qkv[r0:r0 + Np, 2 * Hd:3 * Hd]                # (Np, Hd)

        # Linformer E / F projections for ALL heads fused (contract the seq axis).
        # ew/fw are lane-tiled H times, so the results are already in the lane-packed
        # layout; the static masks zero the cross-head blocks (block-diagonal slabs).
        kp = lax.dot_general(kb, ew, (((0,), (0,)), ((), ())),
                             preferred_element_type=f32)               # (Hd, Hk)
        kp_bd = (kp + eb_rows).astype(mm_dtype) * kmask                # (Hd, Hk)
        vpt = lax.dot_general(fw, vb, (((0,), (0,)), ((), ())),
                              preferred_element_type=f32)              # (Hk, Hd)
        vpt_bd = (vpt + fb_cols).astype(mm_dtype) * vmask              # (Hk, Hd)

        # All heads' scores in ONE matmul; 1/sqrt(d) is already folded into ew/eb.
        s = jnp.dot(qb, kp_bd, preferred_element_type=f32)             # (Np, Hk)
        # One global row-max (softmax is shift-invariant per head; global max >= each
        # head's max, so exp arguments stay <= 0).
        s = s - jnp.max(s, axis=-1, keepdims=True)
        e = jnp.exp(s)
        # Per-head denominators via a same-head-ones matmul on the MXU (one op
        # instead of H XLU reductions); divide via the EUP approximate reciprocal.
        denom = jnp.dot(e.astype(mm_dtype), smask, preferred_element_type=f32)
        p = (e * pl.reciprocal(denom, approx=True)).astype(mm_dtype)   # (Np, Hk)

        # P @ Vp^T for all heads at once -> already the concat(heads) layout.
        o_all = jnp.dot(p, vpt_bd, preferred_element_type=mm_dtype)    # (Np, Hd)
        # Single output projection (contraction K = Hd) + bias; lane-dense store.
        out_b = jnp.dot(o_all, wo, preferred_element_type=f32) + bo_rows
        o_ref[r0:r0 + Np, :] = out_b.astype(o_ref.dtype)


def _round_up(v, m):
    return ((v + m - 1) // m) * m


def mh_attention(x, params, *, mm_dtype=jnp.bfloat16, block_b=None):
    """Linformer MHAttention forward. x: (B, N, C)."""
    B, N, C = x.shape
    wq, wk, wv = params["wq"], params["wk"], params["wv"]   # (H, C, d)
    H, _, d = wq.shape
    Hd = H * d
    dim_k = params["ew"].shape[1]
    Hk = H * dim_k
    f32 = jnp.float32
    out_dtype = x.dtype

    # ---- static packing / folding (pure JAX, runs once, outside the kernel) -------
    def heads_to_slab(w):                                   # (H, C, d) -> (C, H*d)
        return jnp.transpose(w, (1, 0, 2)).reshape(C, Hd)

    wqkv = jnp.concatenate(
        [heads_to_slab(wq), heads_to_slab(wk), heads_to_slab(wv)], axis=-1)  # (C, 3Hd)

    inv_sqrt_d = 1.0 / math.sqrt(d)
    # Pad the sequence axis so sublane slices of the qkv slab stay tile-aligned for
    # both f32 (8) and bf16 (16) layouts; padded K/V/Ew/Fw rows are exact zeros.
    Np = max(16, _round_up(N, 16))
    ew = jnp.pad(params["ew"] * inv_sqrt_d, ((0, Np - N), (0, 0)))     # (Np, k)
    fw = jnp.pad(params["fw"], ((0, Np - N), (0, 0)))                  # (Np, k)
    eb = params["eb"] * inv_sqrt_d                                     # (1, k)
    fb = params["fb"]                                                  # (1, k)
    # Lane-tile E/F (and biases) H times so the kernel's seq-axis contraction lands
    # directly in the lane-packed (block-diagonal) layout - no in-kernel tiles.
    ew_rep = jnp.tile(ew, (1, H))                                      # (Np, Hk)
    fw_rep = jnp.tile(fw, (1, H))                                      # (Np, Hk)
    eb_rep = jnp.tile(eb, (1, H))                                      # (1, Hk)
    fb_rep = jnp.tile(fb, (1, H)).reshape(Hk, 1)                       # (Hk, 1)

    # Static block-diagonal / same-head 0/1 masks for the lane-packed attention.
    row_head = np.arange(Hd) // d
    col_head = np.arange(Hk) // dim_k
    kmask = jnp.asarray(row_head[:, None] == col_head[None, :])        # (Hd, Hk)
    vmask = jnp.asarray(col_head[:, None] == row_head[None, :])        # (Hk, Hd)
    smask = jnp.asarray(col_head[:, None] == col_head[None, :])        # (Hk, Hk)

    # Lane-dense output: pad Wo / bo to a multiple of 128 lanes (unmasked stores);
    # the wrapper slices the zero padding back off.
    c_out = _round_up(C, 128)
    wo = jnp.pad(params["wo"], ((0, 0), (0, c_out - C)))
    bo = jnp.pad(params["bo"], ((0, 0), (0, c_out - C)))

    # MXU operands in mm_dtype (bf16 on v6e/v7x); softmax / biases / accum stay f32.
    # TODO(synk): on v7x an fp8 weight path for wqkv/wo would halve weight bytes;
    # v5e/v6e would need int8 instead, so it must be gated per chip.
    x_p = jnp.pad(x, ((0, 0), (0, Np - N), (0, 0))).astype(mm_dtype)
    x_rows = x_p.reshape(B * Np, C)               # fold batch into the sublane axis
    wqkv = wqkv.astype(mm_dtype)
    ew_rep = ew_rep.astype(mm_dtype)
    fw_rep = fw_rep.astype(mm_dtype)
    wo_mm = wo.astype(mm_dtype)
    kmask = kmask.astype(mm_dtype)
    vmask = vmask.astype(mm_dtype)
    smask = smask.astype(mm_dtype)
    eb_rep = eb_rep.astype(f32)
    fb_rep = fb_rep.astype(f32)
    bo = bo.astype(f32)

    # ---- grid / VMEM plan (generation-aware) ---------------------------------------
    mm_bytes = jnp.dtype(mm_dtype).itemsize
    out_bytes = jnp.dtype(out_dtype).itemsize
    try:  # v5e/v6e: 128 MiB physical VMEM per core; v7x: 64 MiB
        vmem_cap = int(getattr(pltpu.get_tpu_info(), "vmem_capacity_bytes",
                               128 * 1024 * 1024))
    except Exception:
        vmem_cap = 64 * 1024 * 1024
    vmem_limit = int(max(32 << 20, min(64 << 20, (vmem_cap * 3) // 4)))
    vmem_budget = int(vmem_limit * 0.8)

    # Grid-invariant operands (conservatively assume they are double-buffered).
    # TODO(synk): once pipeline_mode=pl.Buffered(1) is verified on the target jax
    # versions, single-buffer these constant-index specs to reclaim VMEM on v7x.
    fixed_bytes = 2 * ((wqkv.size + ew_rep.size + fw_rep.size + wo_mm.size
                        + kmask.size + vmask.size + smask.size) * mm_bytes
                       + (eb_rep.size + fb_rep.size + bo.size) * 4)

    def step_bytes(bb):
        rows = bb * Np
        return (2 * rows * C * mm_bytes            # double-buffered x block
                + 2 * rows * c_out * out_bytes     # double-buffered output block
                + rows * 3 * Hd * mm_bytes         # fused-QKV intermediate (mm dtype)
                + Np * (c_out + 4 * Hk + 2 * Hd) * 4)   # per-b f32 temporaries

    if block_b is None:
        # Keep >= min(B, 4) grid steps (pipelining + both v7x TensorCores via the
        # "parallel" axis); within that, take the largest batch block that fits the
        # VMEM budget so the fused QKV matmul gets a big MXU M-dim on v5e/v6e.
        block_b = 1
        for bb in range(1, B + 1):
            if B % bb:
                continue
            if B // bb < min(B, 4):
                break
            if fixed_bytes + step_bytes(bb) > vmem_budget:
                continue
            block_b = bb
    assert B % block_b == 0

    kernel = functools.partial(
        mha_linformer_kernel, nhead=H, head_dim=d, dim_k=dim_k, bblk=block_b,
        seq_len=Np, mm_dtype=mm_dtype)

    def const_spec(shape):
        return pl.BlockSpec(shape, lambda b: (0,) * len(shape))

    rows_blk = block_b * Np
    # TODO(synk): for realistic Linformer sizes (large N / C) add a second "parallel"
    # grid axis tiling queries over N, with Kp/Vp staged once per batch element, so
    # the per-step working set shrinks and small-B cases still fill both v7x cores.
    out_rows = pl.pallas_call(
        kernel,
        out_shape=jax.ShapeDtypeStruct((B * Np, c_out), out_dtype),
        grid=(B // block_b,),
        in_specs=[
            pl.BlockSpec((rows_blk, C), lambda b: (b, 0)),   # x (folded batch block)
            const_spec((C, 3 * Hd)),                         # packed Wq|Wk|Wv
            const_spec((Np, Hk)),                            # Ew, lane-tiled + pre-scaled
            const_spec((1, Hk)),                             # Eb, lane-tiled + pre-scaled
            const_spec((Np, Hk)),                            # Fw, lane-tiled
            const_spec((Hk, 1)),                             # Fb, tiled (column layout)
            const_spec((Hd, Hk)),                            # K block-diag mask
            const_spec((Hk, Hd)),                            # V block-diag mask
            const_spec((Hk, Hk)),                            # same-head mask
            const_spec((Hd, c_out)),                         # Wo (lane-padded)
            const_spec((1, c_out)),                          # bo (lane-padded)
        ],
        out_specs=pl.BlockSpec((rows_blk, c_out), lambda b: (b, 0)),
        compiler_params=pltpu.CompilerParams(
            dimension_semantics=("parallel",),
            vmem_limit_bytes=vmem_limit,
        ),
    )(x_rows, wqkv, ew_rep, eb_rep, fw_rep, fb_rep,
      kmask, vmask, smask, wo_mm, bo)

    out = out_rows.reshape(B, Np, c_out)
    return out[:, :N, :C]


def reference(x, params):
    """Pure-JAX f32 reference mirroring the PyTorch forward."""
    H, _, d = params["wq"].shape
    outs = []
    for h in range(H):
        q = x @ params["wq"][h]
        k = x @ params["wk"][h]
        v = x @ params["wv"][h]
        kp = jnp.einsum("bnd,nk->bdk", k, params["ew"]) + params["eb"][0]
        vp = jnp.einsum("bnd,nk->bdk", v, params["fw"]) + params["fb"][0]
        s = jnp.einsum("bnd,bdk->bnk", q, kp) / jnp.sqrt(jnp.float32(d))
        p = jax.nn.softmax(s, axis=-1)
        outs.append(jnp.einsum("bnk,bdk->bnd", p, vp))
    cat = jnp.concatenate(outs, axis=-1)
    return cat @ params["wo"] + params["bo"][0]


def init_params(key, *, input_size, channels, dim, dim_k, nhead):
    ks = jax.random.split(key, 10)
    f32 = jnp.float32
    # to_q/to_k/to_v: Linear(channels, dim, bias=False) per head, stored as (H, C, d)
    scale_qkv = 1.0 / np.sqrt(channels)
    wq = jax.random.normal(ks[0], (nhead, channels, dim), f32) * scale_qkv
    wk = jax.random.normal(ks[1], (nhead, channels, dim), f32) * scale_qkv
    wv = jax.random.normal(ks[2], (nhead, channels, dim), f32) * scale_qkv
    # E/F: Linear(input_size, dim_k, bias=True), xavier-normal std, shared across heads
    xav = np.sqrt(2.0 / (input_size + dim_k))
    ew = jax.random.normal(ks[3], (input_size, dim_k), f32) * xav
    eb = jax.random.normal(ks[4], (1, dim_k), f32) * 0.1
    fw = jax.random.normal(ks[5], (input_size, dim_k), f32) * xav
    fb = jax.random.normal(ks[6], (1, dim_k), f32) * 0.1
    # w_o: Linear(dim * nhead, channels)
    scale_o = 1.0 / np.sqrt(dim * nhead)
    wo = jax.random.normal(ks[7], (dim * nhead, channels), f32) * scale_o
    bo = jax.random.normal(ks[8], (1, channels), f32) * 0.1
    return dict(wq=wq, wk=wk, wv=wv, ew=ew, eb=eb, fw=fw, fb=fb, wo=wo, bo=bo)


if __name__ == "__main__":
    # Small config: batch=2, seq(input_size)=16, channels=32, head dim=16, dim_k=8, nhead=4
    B, N, C, D, K, H = 2, 16, 32, 16, 8, 4

    key = jax.random.PRNGKey(0)
    k_x, k_p = jax.random.split(key)
    x = jax.random.normal(k_x, (B, N, C), jnp.float32)
    params = init_params(k_p, input_size=N, channels=C, dim=D, dim_k=K, nhead=H)

    ref = jax.block_until_ready(reference(x, params))

    # f32 MXU-operand structural check. Tolerance covers the default MXU matmul
    # precision (bf16 operand passes) used by both the kernel and the XLA reference,
    # plus the EUP approximate reciprocal in the softmax denominator.
    out_f32 = jax.block_until_ready(mh_attention(x, params, mm_dtype=jnp.float32))
    np.testing.assert_allclose(np.asarray(out_f32), np.asarray(ref), rtol=1e-2, atol=1e-2)

    # Recommended perf config (bf16 MXU operands; softmax/biases/accum stay f32).
    out_bf16 = jax.block_until_ready(mh_attention(x, params, mm_dtype=jnp.bfloat16))
    np.testing.assert_allclose(np.asarray(out_bf16), np.asarray(ref), rtol=5e-2, atol=5e-2)

    # TODO(synk): dropout layers are identity (eval / p=0); the 'convolution' and
    # 'no_params' E/F variants, decoder mode, input/causal masks and the
    # w_o_intermediate_dim two-stage output projection are not exercised.
    print("KERNEL_OK")
</pallas_src>

<mosaic_0001>
module attributes {stable_mosaic.version = 11 : i64} {
  func.func @mha_linformer_kernel(%arg0: i32, %arg1: memref<16x32xf32, #tpu.memory_space<vmem>>, %arg2: memref<32x192xf32, #tpu.memory_space<vmem>>, %arg3: memref<16x32xf32, #tpu.memory_space<vmem>>, %arg4: memref<1x32xf32, #tpu.memory_space<vmem>>, %arg5: memref<16x32xf32, #tpu.memory_space<vmem>>, %arg6: memref<32x1xf32, #tpu.memory_space<vmem>>, %arg7: memref<64x32xf32, #tpu.memory_space<vmem>>, %arg8: memref<32x64xf32, #tpu.memory_space<vmem>>, %arg9: memref<32x32xf32, #tpu.memory_space<vmem>>, %arg10: memref<64x128xf32, #tpu.memory_space<vmem>>, %arg11: memref<1x128xf32, #tpu.memory_space<vmem>>, %arg12: memref<16x128xf32, #tpu.memory_space<vmem>>) attributes {dimension_semantics = [#tpu.dimension_semantics<parallel>], iteration_bounds = array<i64: 2>, scalar_prefetch = 0 : i64, scratch_operands = 0 : i64, tpu.core_type = #tpu.core_type<tc>, window_params = [{transform_indices = @transform_0, window_bounds = array<i64: 16, 32>}, {pipeline_mode = #tpu.pipeline_mode<synchronous>, transform_indices = @transform_1, window_bounds = array<i64: 32, 192>}, {pipeline_mode = #tpu.pipeline_mode<synchronous>, transform_indices = @transform_2, window_bounds = array<i64: 16, 32>}, {pipeline_mode = #tpu.pipeline_mode<synchronous>, transform_indices = @transform_3, window_bounds = array<i64: 1, 32>}, {pipeline_mode = #tpu.pipeline_mode<synchronous>, transform_indices = @transform_4, window_bounds = array<i64: 16, 32>}, {pipeline_mode = #tpu.pipeline_mode<synchronous>, transform_indices = @transform_5, window_bounds = array<i64: 32, 1>}, {pipeline_mode = #tpu.pipeline_mode<synchronous>, transform_indices = @transform_6, window_bounds = array<i64: 64, 32>}, {pipeline_mode = #tpu.pipeline_mode<synchronous>, transform_indices = @transform_7, window_bounds = array<i64: 32, 64>}, {pipeline_mode = #tpu.pipeline_mode<synchronous>, transform_indices = @transform_8, window_bounds = array<i64: 32, 32>}, {pipeline_mode = #tpu.pipeline_mode<synchronous>, transform_indices = @transform_9, window_bounds = array<i64: 64, 128>}, {pipeline_mode = #tpu.pipeline_mode<synchronous>, transform_indices = @transform_10, window_bounds = array<i64: 1, 128>}, {transform_indices = @transform_11, window_bounds = array<i64: 16, 128>}]} {
    %c0 = arith.constant 0 : index
    %c0_0 = arith.constant 0 : index
    %0 = vector.load %arg2[%c0, %c0_0] : memref<32x192xf32, #tpu.memory_space<vmem>>, vector<32x192xf32>
    %c0_1 = arith.constant 0 : index
    %c0_2 = arith.constant 0 : index
    %1 = vector.load %arg3[%c0_1, %c0_2] : memref<16x32xf32, #tpu.memory_space<vmem>>, vector<16x32xf32>
    %c0_3 = arith.constant 0 : index
    %c0_4 = arith.constant 0 : index
    %2 = vector.load %arg5[%c0_3, %c0_4] : memref<16x32xf32, #tpu.memory_space<vmem>>, vector<16x32xf32>
    %c0_5 = arith.constant 0 : index
    %c0_6 = arith.constant 0 : index
    %3 = vector.load %arg7[%c0_5, %c0_6] : memref<64x32xf32, #tpu.memory_space<vmem>>, vector<64x32xf32>
    %c0_7 = arith.constant 0 : index
    %c0_8 = arith.constant 0 : index
    %4 = vector.load %arg8[%c0_7, %c0_8] : memref<32x64xf32, #tpu.memory_space<vmem>>, vector<32x64xf32>
    %c0_9 = arith.constant 0 : index
    %c0_10 = arith.constant 0 : index
    %5 = vector.load %arg9[%c0_9, %c0_10] : memref<32x32xf32, #tpu.memory_space<vmem>>, vector<32x32xf32>
    %c0_11 = arith.constant 0 : index
    %c0_12 = arith.constant 0 : index
    %6 = vector.load %arg10[%c0_11, %c0_12] : memref<64x128xf32, #tpu.memory_space<vmem>>, vector<64x128xf32>
    %c0_13 = arith.constant 0 : index
    %c0_14 = arith.constant 0 : index
    %7 = vector.load %arg4[%c0_13, %c0_14] : memref<1x32xf32, #tpu.memory_space<vmem>>, vector<1x32xf32>
    %8 = vector.shape_cast %7 : vector<1x32xf32> to vector<1x32xf32>
    %9 = vector.broadcast %8 : vector<1x32xf32> to vector<64x32xf32>
    %c0_15 = arith.constant 0 : index
    %c0_16 = arith.constant 0 : index
    %10 = vector.load %arg6[%c0_15, %c0_16] : memref<32x1xf32, #tpu.memory_space<vmem>>, vector<32x1xf32>
    %11 = vector.shape_cast %10 : vector<32x1xf32> to vector<32x1xf32>
    %12 = vector.broadcast %11 : vector<32x1xf32> to vector<32x64xf32>
    %c0_17 = arith.constant 0 : index
    %c0_18 = arith.constant 0 : index
    %13 = vector.load %arg11[%c0_17, %c0_18] : memref<1x128xf32, #tpu.memory_space<vmem>>, vector<1x128xf32>
    %14 = vector.shape_cast %13 : vector<1x128xf32> to vector<1x128xf32>
    %15 = vector.broadcast %14 : vector<1x128xf32> to vector<16x128xf32>
    %c0_19 = arith.constant 0 : index
    %c0_20 = arith.constant 0 : index
    %16 = vector.load %arg1[%c0_19, %c0_20] : memref<16x32xf32, #tpu.memory_space<vmem>>, vector<16x32xf32>
    %cst = arith.constant dense<0.000000e+00> : vector<16x192xf32>
    %17 = tpu.matmul %16, %0, %cst {dimension_numbers = #tpu.dot_dimension_numbers<[1], [0], [0], [1], [0, 0, 1, 1], [], []>} : vector<16x32xf32>, vector<32x192xf32>, vector<16x192xf32> -> vector<16x192xf32>
    %18 = vector.extract_strided_slice %17 {offsets = [0, 0], sizes = [16, 64], strides = [1, 1]} : vector<16x192xf32> to vector<16x64xf32>
    %19 = vector.extract_strided_slice %17 {offsets = [0, 64], sizes = [16, 64], strides = [1, 1]} : vector<16x192xf32> to vector<16x64xf32>
    %20 = vector.extract_strided_slice %17 {offsets = [0, 128], sizes = [16, 64], strides = [1, 1]} : vector<16x192xf32> to vector<16x64xf32>
    %cst_21 = arith.constant dense<0.000000e+00> : vector<64x32xf32>
    %21 = tpu.matmul %19, %1, %cst_21 {dimension_numbers = #tpu.dot_dimension_numbers<[0], [0], [1], [1], [0, 1, 1, 1], [], []>} : vector<16x64xf32>, vector<16x32xf32>, vector<64x32xf32> -> vector<64x32xf32>
    %22 = arith.addf %21, %9 : vector<64x32xf32>
    %23 = arith.mulf %22, %3 : vector<64x32xf32>
    %cst_22 = arith.constant dense<0.000000e+00> : vector<32x64xf32>
    %24 = tpu.matmul %2, %20, %cst_22 {dimension_numbers = #tpu.dot_dimension_numbers<[0], [0], [1], [1], [0, 1, 1, 1], [], []>} : vector<16x32xf32>, vector<16x64xf32>, vector<32x64xf32> -> vector<32x64xf32>
    %25 = arith.addf %24, %12 : vector<32x64xf32>
    %26 = arith.mulf %25, %4 : vector<32x64xf32>
    %cst_23 = arith.constant dense<0.000000e+00> : vector<16x32xf32>
    %27 = tpu.matmul %18, %23, %cst_23 {dimension_numbers = #tpu.dot_dimension_numbers<[1], [0], [0], [1], [0, 0, 1, 1], [], []>} : vector<16x64xf32>, vector<64x32xf32>, vector<16x32xf32> -> vector<16x32xf32>
    %cst_24 = arith.constant dense<0xFF800000> : vector<16xf32>
    %28 = vector.multi_reduction <maximumf>, %27, %cst_24 [1] : vector<16x32xf32> to vector<16xf32>
    %29 = vector.shape_cast %28 : vector<16xf32> to vector<16x1xf32>
    %30 = vector.broadcast %29 : vector<16x1xf32> to vector<16x32xf32>
    %31 = arith.subf %27, %30 : vector<16x32xf32>
    %32 = math.exp %31 : vector<16x32xf32>
    %cst_25 = arith.constant dense<0.000000e+00> : vector<16x32xf32>
    %33 = tpu.matmul %32, %5, %cst_25 {dimension_numbers = #tpu.dot_dimension_numbers<[1], [0], [0], [1], [0, 0, 1, 1], [], []>} : vector<16x32xf32>, vector<32x32xf32>, vector<16x32xf32> -> vector<16x32xf32>
    %34 = tpu.reciprocal %33 {approx = true} : vector<16x32xf32> -> vector<16x32xf32>
    %35 = arith.mulf %32, %34 : vector<16x32xf32>
    %cst_26 = arith.constant dense<0.000000e+00> : vector<16x64xf32>
    %36 = tpu.matmul %35, %26, %cst_26 {dimension_numbers = #tpu.dot_dimension_numbers<[1], [0], [0], [1], [0, 0, 1, 1], [], []>} : vector<16x32xf32>, vector<32x64xf32>, vector<16x64xf32> -> vector<16x64xf32>
    %cst_27 = arith.constant dense<0.000000e+00> : vector<16x128xf32>
    %37 = tpu.matmul %36, %6, %cst_27 {dimension_numbers = #tpu.dot_dimension_numbers<[1], [0], [0], [1], [0, 0, 1, 1], [], []>} : vector<16x64xf32>, vector<64x128xf32>, vector<16x128xf32> -> vector<16x128xf32>
    %38 = arith.addf %37, %15 : vector<16x128xf32>
    %c0_28 = arith.constant 0 : index
    %c0_29 = arith.constant 0 : index
    %39 = vector.load %arg12[%c0_28, %c0_29] : memref<16x128xf32, #tpu.memory_space<vmem>>, vector<16x128xf32>
    tpu.vector_store %arg12[%c0_28, %c0_29], %38 {strides = array<i32>} : memref<16x128xf32, #tpu.memory_space<vmem>>, vector<16x128xf32>,
    return
  }
  func.func @transform_0(%arg0: i32) -> (i32, i32) {
    %c0_i32 = arith.constant 0 : i32
    %c0_i32_0 = arith.constant 0 : i32
    return %arg0, %c0_i32 : i32, i32
  }
  func.func @transform_1(%arg0: i32) -> (i32, i32) {
    %c0_i32 = arith.constant 0 : i32
    %c0_i32_0 = arith.constant 0 : i32
    %c0_i32_1 = arith.constant 0 : i32
    return %c0_i32, %c0_i32_0 : i32, i32
  }
  func.func @transform_2(%arg0: i32) -> (i32, i32) {
    %c0_i32 = arith.constant 0 : i32
    %c0_i32_0 = arith.constant 0 : i32
    %c0_i32_1 = arith.constant 0 : i32
    return %c0_i32, %c0_i32_0 : i32, i32
  }
  func.func @transform_3(%arg0: i32) -> (i32, i32) {
    %c0_i32 = arith.constant 0 : i32
    %c0_i32_0 = arith.constant 0 : i32
    %c0_i32_1 = arith.constant 0 : i32
    return %c0_i32, %c0_i32_0 : i32, i32
  }
  func.func @transform_4(%arg0: i32) -> (i32, i32) {
    %c0_i32 = arith.constant 0 : i32
    %c0_i32_0 = arith.constant 0 : i32
    %c0_i32_1 = arith.constant 0 : i32
    return %c0_i32, %c0_i32_0 : i32, i32
  }
  func.func @transform_5(%arg0: i32) -> (i32, i32) {
    %c0_i32 = arith.constant 0 : i32
    %c0_i32_0 = arith.constant 0 : i32
    %c0_i32_1 = arith.constant 0 : i32
    return %c0_i32, %c0_i32_0 : i32, i32
  }
  func.func @transform_6(%arg0: i32) -> (i32, i32) {
    %c0_i32 = arith.constant 0 : i32
    %c0_i32_0 = arith.constant 0 : i32
    %c0_i32_1 = arith.constant 0 : i32
    return %c0_i32, %c0_i32_0 : i32, i32
  }
  func.func @transform_7(%arg0: i32) -> (i32, i32) {
    %c0_i32 = arith.constant 0 : i32
    %c0_i32_0 = arith.constant 0 : i32
    %c0_i32_1 = arith.constant 0 : i32
    return %c0_i32, %c0_i32_0 : i32, i32
  }
  func.func @transform_8(%arg0: i32) -> (i32, i32) {
    %c0_i32 = arith.constant 0 : i32
    %c0_i32_0 = arith.constant 0 : i32
    %c0_i32_1 = arith.constant 0 : i32
    return %c0_i32, %c0_i32_0 : i32, i32
  }
  func.func @transform_9(%arg0: i32) -> (i32, i32) {
    %c0_i32 = arith.constant 0 : i32
    %c0_i32_0 = arith.constant 0 : i32
    %c0_i32_1 = arith.constant 0 : i32
    return %c0_i32, %c0_i32_0 : i32, i32
  }
  func.func @transform_10(%arg0: i32) -> (i32, i32) {
    %c0_i32 = arith.constant 0 : i32
    %c0_i32_0 = arith.constant 0 : i32
    %c0_i32_1 = arith.constant 0 : i32
    return %c0_i32, %c0_i32_0 : i32, i32
  }
  func.func @transform_11(%arg0: i32) -> (i32, i32) {
    %c0_i32 = arith.constant 0 : i32
    %c0_i32_0 = arith.constant 0 : i32
    return %arg0, %c0_i32 : i32, i32
  }
}

</mosaic_0001>

<llo_original>
// kernel: tpu_custom_call.1
$region0: #{tpu_custom_call.1}
  #allocation0 [shape = 'u32[]', space=smem, size = 0x4, offset = 0x4, fixed_abs, tag = 'smem constant byte address 0x4 - core index']
  #allocation1 [shape = 'u32[72,128]{1,0:T(1,128)}', space=vmem, size = 0x9000, scoped, tag = 'internal scratch']
  %s0 = inlined_call_operand.vmem [shape: f32[32,32], index: 0, kind: input, shape index: {}]
  %s1 = inlined_call_operand.vmem [shape: f32[32,192], index: 1, kind: input, shape index: {}]
  %s2 = inlined_call_operand.hbm [shape: f32[16,32], index: 2, kind: input, shape index: {}]
  %s3 = inlined_call_operand.vmem [shape: f32[1,32], index: 3, kind: input, shape index: {}]
  %s4 = inlined_call_operand.hbm [shape: f32[16,32], index: 4, kind: input, shape index: {}]
  %s5 = inlined_call_operand.vmem [shape: f32[32,1], index: 5, kind: input, shape index: {}]
  %s6 = inlined_call_operand.vmem [shape: f32[64,32], index: 6, kind: input, shape index: {}]
  %s7 = inlined_call_operand.hbm [shape: f32[32,64], index: 7, kind: input, shape index: {}]
  %s8 = inlined_call_operand.hbm [shape: f32[32,32], index: 8, kind: input, shape index: {}]
  %s9 = inlined_call_operand.hbm [shape: f32[64,128], index: 9, kind: input, shape index: {}]
  %s10 = inlined_call_operand.vmem [shape: f32[1,128], index: 10, kind: input, shape index: {}]
  %s11 = inlined_call_operand.hbm [shape: f32[32,128], index: 11, kind: output, shape index: {}]
  %s12 = sld [smem:[#allocation0]]
  $region97: #{tpu_custom_call.1} parent=0
    _
  %s14 = ssub.s32 1, %s12
  %s15 = scalar_select 0, %s14, %s12
  $region1: #{tpu_custom_call.1} parent=0
    #allocation2 [shape = 'u8[8192]{0}', space=vmem, size = 0x2000, scoped, tag = 'input window, operand 2, single buffered']
    #allocation3 [shape = 's32[2]{0}', space=sflag, size = 0x8, scoped, tag = 'scoped memory for tpu_custom_call.1']
    #allocation4 [shape = 's32[2]{0}', space=sflag, size = 0x8, scoped, tag = 'scoped memory for tpu_custom_call.1']
    #allocation5 [shape = 'u8[8192]{0}', space=vmem, size = 0x2000, scoped, tag = 'input window, operand 4, single buffered']
    #allocation6 [shape = 's32[1]{0}', space=sflag, size = 0x4, scoped, tag = 'scoped memory for tpu_custom_call.1']
    #allocation7 [shape = 'u8[16384]{0}', space=vmem, size = 0x4000, scoped, tag = 'input window, operand 7, single buffered']
    #allocation8 [shape = 'u8[16384]{0}', space=vmem, size = 0x4000, scoped, tag = 'input window, operand 8, single buffered']
    #allocation9 [shape = 's32[1]{0}', space=sflag, size = 0x4, scoped, tag = 'scoped memory for tpu_custom_call.1']
    #allocation10 [shape = 'u8[32768]{0}', space=vmem, size = 0x8000, scoped, tag = 'input window, operand 9, single buffered']
    #allocation11 [shape = 'u8[16384]{0}', space=vmem, size = 0x4000, scoped, tag = 'output window, operand 0']
    %16 = vsyncpa [#allocation3], 0
    %17 = vsyncpa [#allocation6], 0
    %18 = vsyncpa [#allocation9], 0
    %19 = vsyncpa [#allocation4], 0
    %s20 = scalar_lea.sflag [#allocation4], 1
    %21 = vsyncpa %s20, 0
    loop: start=0, step=1, limit=4
    $region2: #{tpu_custom_call.1} parent=1 // loop_pre_header
      _
    $region3: #{tpu_custom_call.1} parent=1 // loop_header
      %s23 = sphi 0, %s27
      %p24 = scmp.ge.s32.totalorder %s23, 4
      %s33 = sphi 0, %s35
      %s36 = sphi 0, %s33
      %s37 = sphi 0, %s36
      %s53 = sphi 0, %s37
      %s57 = sphi 0, %s57
      %s59 = sphi 0, %s57
      %s60 = sphi 0, %s59
      %s74 = sphi 0, %s60
      %s78 = sphi 0, %s78
      %s80 = sphi 0, %s78
      %s81 = sphi 0, %s80
      %s95 = sphi 0, %s81
      %s99 = sphi 0, %s99
      %s101 = sphi 0, %s99
      %s102 = sphi 0, %s101
      %s116 = sphi 0, %s102
      %s120 = sphi 0, %s120
      %s122 = sphi 0, %s120
      %s123 = sphi 0, %s122
      %s137 = sphi 0, %s123
      %s141 = sphi 0, %s141
      %s143 = sphi 0, %s141
      %s144 = sphi 0, %s143
      %s158 = sphi 0, %s144
      %s162 = sphi 0, %s162
      %s164 = sphi 0, %s162
      %s165 = sphi 0, %s164
      %s179 = sphi 0, %s165
      %s183 = sphi 0, %s183
      %s185 = sphi 0, %s183
      %s186 = sphi 0, %s185
      %s200 = sphi 0, %s186
      %s204 = sphi 0, %s204
      %s206 = sphi 0, %s204
      %s207 = sphi 0, %s206
      %s221 = sphi 0, %s207
      %s225 = sphi 0, %s225
      %s227 = sphi 0, %s225
      %s228 = sphi 0, %s227
      %s242 = sphi 0, %s228
      %s246 = sphi 0, %s246
      %s248 = sphi 0, %s246
      %s249 = sphi 0, %s248
      %s263 = sphi 0, %s249
      %s269 = sphi 0, %s271
      %s272 = sphi 0, %s269
      %s273 = sphi 0, %s272
      %s289 = sphi 0, %s273
    $region4: #{tpu_custom_call.1} parent=1 // loop_header_branch
      %26 = sbr.rel (%p24) target = $region8
    $region5: #{tpu_custom_call.1} parent=1 // loop_body
      %s28 = ssub.s32 %s23, 1
      %s29 = ssub.s32 %s23, 2
      %s30 = sadd.s32 %s23, 1
      %s31 = ssub.s32 %s23, %s30
      %p32 = scmp.eq.s32.totalorder %s31, 0
      %s34 = sadd.s32 %s33, 1
      %s35 = scalar_select %p32, %s33, %s34
      %p38 = pneg %p32
      %p39 = scmp.eq.s32.totalorder %s23, 1
      %p40 = por %p38, %p39
      %p41 = scmp.ne.s32.totalorder %s33, %s36
      %p42 = scmp.eq.s32.totalorder %s23, 0
      %p43 = por %p41, %p42
      %p44 = scmp.ne.s32.totalorder %s33, %s36
      %p45 = scmp.eq.s32.totalorder %s28, 1
      %p46 = por %p44, %p45
      %p47 = scmp.ne.s32.totalorder %s36, %s37
      %p48 = scmp.eq.s32.totalorder %s28, 0
      %p49 = por %p47, %p48
      %p50 = scmp.ne.s32.totalorder %s36, %s37
      %p51 = scmp.eq.s32.totalorder %s29, 1
      %p52 = por %p50, %p51
      %p54 = scmp.ne.s32.totalorder %s37, %s53
      %p55 = scmp.eq.s32.totalorder %s29, 0
      %p56 = por %p54, %p55
      %s58 = sadd.s32 %s57, 1
      %p61 = scmp.eq.s32.totalorder %s23, 1
      %p62 = scmp.ne.s32.totalorder %s57, %s59
      %p63 = scmp.eq.s32.totalorder %s23, 0
      %p64 = por %p62, %p63
      %p65 = scmp.ne.s32.totalorder %s57, %s59
      %p66 = scmp.eq.s32.totalorder %s28, 1
      %p67 = por %p65, %p66
      %p68 = scmp.ne.s32.totalorder %s59, %s60
      %p69 = scmp.eq.s32.totalorder %s28, 0
      %p70 = por %p68, %p69
      %p71 = scmp.ne.s32.totalorder %s59, %s60
      %p72 = scmp.eq.s32.totalorder %s29, 1
      %p73 = por %p71, %p72
      %p75 = scmp.ne.s32.totalorder %s60, %s74
      %p76 = scmp.eq.s32.totalorder %s29, 0
      %p77 = por %p75, %p76
      %s79 = sadd.s32 %s78, 1
      %p82 = scmp.eq.s32.totalorder %s23, 1
      %p83 = scmp.ne.s32.totalorder %s78, %s80
      %p84 = scmp.eq.s32.totalorder %s23, 0
      %p85 = por %p83, %p84
      %p86 = scmp.ne.s32.totalorder %s78, %s80
      %p87 = scmp.eq.s32.totalorder %s28, 1
      %p88 = por %p86, %p87
      %p89 = scmp.ne.s32.totalorder %s80, %s81
      %p90 = scmp.eq.s32.totalorder %s28, 0
      %p91 = por %p89, %p90
      %p92 = scmp.ne.s32.totalorder %s80, %s81
      %p93 = scmp.eq.s32.totalorder %s29, 1
      %p94 = por %p92, %p93
      %p96 = scmp.ne.s32.totalorder %s81, %s95
      %p97 = scmp.eq.s32.totalorder %s29, 0
      %p98 = por %p96, %p97
      %s100 = sadd.s32 %s99, 1
      %p103 = scmp.eq.s32.totalorder %s23, 1
      %p104 = scmp.ne.s32.totalorder %s99, %s101
      %p105 = scmp.eq.s32.totalorder %s23, 0
      %p106 = por %p104, %p105
      %p107 = scmp.ne.s32.totalorder %s99, %s101
      %p108 = scmp.eq.s32.totalorder %s28, 1
      %p109 = por %p107, %p108
      %p110 = scmp.ne.s32.totalorder %s101, %s102
      %p111 = scmp.eq.s32.totalorder %s28, 0
      %p112 = por %p110, %p111
      %p113 = scmp.ne.s32.totalorder %s101, %s102
      %p114 = scmp.eq.s32.totalorder %s29, 1
      %p115 = por %p113, %p114
      %p117 = scmp.ne.s32.totalorder %s102, %s116
      %p118 = scmp.eq.s32.totalorder %s29, 0
      %p119 = por %p117, %p118
      %s121 = sadd.s32 %s120, 1
      %p124 = scmp.eq.s32.totalorder %s23, 1
      %p125 = scmp.ne.s32.totalorder %s120, %s122
      %p126 = scmp.eq.s32.totalorder %s23, 0
      %p127 = por %p125, %p126
      %p128 = scmp.ne.s32.totalorder %s120, %s122
      %p129 = scmp.eq.s32.totalorder %s28, 1
      %p130 = por %p128, %p129
      %p131 = scmp.ne.s32.totalorder %s122, %s123
      %p132 = scmp.eq.s32.totalorder %s28, 0
      %p133 = por %p131, %p132
      %p134 = scmp.ne.s32.totalorder %s122, %s123
      %p135 = scmp.eq.s32.totalorder %s29, 1
      %p136 = por %p134, %p135
      %p138 = scmp.ne.s32.totalorder %s123, %s137
      %p139 = scmp.eq.s32.totalorder %s29, 0
      %p140 = por %p138, %p139
      %s142 = sadd.s32 %s141, 1
      %p145 = scmp.eq.s32.totalorder %s23, 1
      %p146 = scmp.ne.s32.totalorder %s141, %s143
      %p147 = scmp.eq.s32.totalorder %s23, 0
      %p148 = por %p146, %p147
      %p149 = scmp.ne.s32.totalorder %s141, %s143
      %p150 = scmp.eq.s32.totalorder %s28, 1
      %p151 = por %p149, %p150
      %p152 = scmp.ne.s32.totalorder %s143, %s144
      %p153 = scmp.eq.s32.totalorder %s28, 0
      %p154 = por %p152, %p153
      %p155 = scmp.ne.s32.totalorder %s143, %s144
      %p156 = scmp.eq.s32.totalorder %s29, 1
      %p157 = por %p155, %p156
      %p159 = scmp.ne.s32.totalorder %s144, %s158
      %p160 = scmp.eq.s32.totalorder %s29, 0
      %p161 = por %p159, %p160
      %s163 = sadd.s32 %s162, 1
      %p166 = scmp.eq.s32.totalorder %s23, 1
      %p167 = scmp.ne.s32.totalorder %s162, %s164
      %p168 = scmp.eq.s32.totalorder %s23, 0
      %p169 = por %p167, %p168
      %p170 = scmp.ne.s32.totalorder %s162, %s164
      %p171 = scmp.eq.s32.totalorder %s28, 1
      %p172 = por %p170, %p171
      %p173 = scmp.ne.s32.totalorder %s164, %s165
      %p174 = scmp.eq.s32.totalorder %s28, 0
      %p175 = por %p173, %p174
      %p176 = scmp.ne.s32.totalorder %s164, %s165
      %p177 = scmp.eq.s32.totalorder %s29, 1
      %p178 = por %p176, %p177
      %p180 = scmp.ne.s32.totalorder %s165, %s179
      %p181 = scmp.eq.s32.totalorder %s29, 0
      %p182 = por %p180, %p181
      %s184 = sadd.s32 %s183, 1
      %p187 = scmp.eq.s32.totalorder %s23, 1
      %p188 = scmp.ne.s32.totalorder %s183, %s185
      %p189 = scmp.eq.s32.totalorder %s23, 0
      %p190 = por %p188, %p189
      %p191 = scmp.ne.s32.totalorder %s183, %s185
      %p192 = scmp.eq.s32.totalorder %s28, 1
      %p193 = por %p191, %p192
      %p194 = scmp.ne.s32.totalorder %s185, %s186
      %p195 = scmp.eq.s32.totalorder %s28, 0
      %p196 = por %p194, %p195
      %p197 = scmp.ne.s32.totalorder %s185, %s186
      %p198 = scmp.eq.s32.totalorder %s29, 1
      %p199 = por %p197, %p198
      %p201 = scmp.ne.s32.totalorder %s186, %s200
      %p202 = scmp.eq.s32.totalorder %s29, 0
      %p203 = por %p201, %p202
      %s205 = sadd.s32 %s204, 1
      %p208 = scmp.eq.s32.totalorder %s23, 1
      %p209 = scmp.ne.s32.totalorder %s204, %s206
      %p210 = scmp.eq.s32.totalorder %s23, 0
      %p211 = por %p209, %p210
      %p212 = scmp.ne.s32.totalorder %s204, %s206
      %p213 = scmp.eq.s32.totalorder %s28, 1
      %p214 = por %p212, %p213
      %p215 = scmp.ne.s32.totalorder %s206, %s207
      %p216 = scmp.eq.s32.totalorder %s28, 0
      %p217 = por %p215, %p216
      %p218 = scmp.ne.s32.totalorder %s206, %s207
      %p219 = scmp.eq.s32.totalorder %s29, 1
      %p220 = por %p218, %p219
      %p222 = scmp.ne.s32.totalorder %s207, %s221
      %p223 = scmp.eq.s32.totalorder %s29, 0
      %p224 = por %p222, %p223
      %s226 = sadd.s32 %s225, 1
      %p229 = scmp.eq.s32.totalorder %s23, 1
      %p230 = scmp.ne.s32.totalorder %s225, %s227
      %p231 = scmp.eq.s32.totalorder %s23, 0
      %p232 = por %p230, %p231
      %p233 = scmp.ne.s32.totalorder %s225, %s227
      %p234 = scmp.eq.s32.totalorder %s28, 1
      %p235 = por %p233, %p234
      %p236 = scmp.ne.s32.totalorder %s227, %s228
      %p237 = scmp.eq.s32.totalorder %s28, 0
      %p238 = por %p236, %p237
      %p239 = scmp.ne.s32.totalorder %s227, %s228
      %p240 = scmp.eq.s32.totalorder %s29, 1
      %p241 = por %p239, %p240
      %p243 = scmp.ne.s32.totalorder %s228, %s242
      %p244 = scmp.eq.s32.totalorder %s29, 0
      %p245 = por %p243, %p244
      %s247 = sadd.s32 %s246, 1
      %p250 = scmp.eq.s32.totalorder %s23, 1
      %p251 = scmp.ne.s32.totalorder %s246, %s248
      %p252 = scmp.eq.s32.totalorder %s23, 0
      %p253 = por %p251, %p252
      %p254 = scmp.ne.s32.totalorder %s246, %s248
      %p255 = scmp.eq.s32.totalorder %s28, 1
      %p256 = por %p254, %p255
      %p257 = scmp.ne.s32.totalorder %s248, %s249
      %p258 = scmp.eq.s32.totalorder %s28, 0
      %p259 = por %p257, %p258
      %p260 = scmp.ne.s32.totalorder %s248, %s249
      %p261 = scmp.eq.s32.totalorder %s29, 1
      %p262 = por %p260, %p261
      %p264 = scmp.ne.s32.totalorder %s249, %s263
      %p265 = scmp.eq.s32.totalorder %s29, 0
      %p266 = por %p264, %p265
      %s267 = ssub.s32 %s23, %s30
      %p268 = scmp.eq.s32.totalorder %s267, 0
      %s270 = sadd.s32 %s269, 1
      %s271 = scalar_select %p268, %s269, %s270
      %p274 = pneg %p268
      %p275 = scmp.eq.s32.totalorder %s23, 1
      %p276 = por %p274, %p275
      %p277 = scmp.ne.s32.totalorder %s269, %s272
      %p278 = scmp.eq.s32.totalorder %s23, 0
      %p279 = por %p277, %p278
      %p280 = scmp.ne.s32.totalorder %s269, %s272
      %p281 = scmp.eq.s32.totalorder %s28, 1
      %p282 = por %p280, %p281
      %p283 = scmp.ne.s32.totalorder %s272, %s273
      %p284 = scmp.eq.s32.totalorder %s28, 0
      %p285 = por %p283, %p284
      %p286 = scmp.ne.s32.totalorder %s272, %s273
      %p287 = scmp.eq.s32.totalorder %s29, 1
      %p288 = por %p286, %p287
      %p290 = scmp.ne.s32.totalorder %s273, %s289
      %p291 = scmp.eq.s32.totalorder %s29, 0
      %p292 = por %p290, %p291
      %p293 = scmp.le.s32.totalorder 1, %s23
      %p294 = scmp.lt.s32.totalorder %s23, 3
      %p295 = pnand %p293, %p294
      %p296 = pneg %p295
      // Predicated region
      $region9: #{tpu_custom_call.1} parent=5 // pred_check
        _
      $region10: #{tpu_custom_call.1} parent=5 // pred_check_branch
        %298 = sbr.rel (%p295) target = $region12
      $region11: #{tpu_custom_call.1} parent=5 // pred_region
        %s299 = ssub.s32 %s23, 1
        // Predicated region
        $region13: #{tpu_custom_call.1} parent=11 // pred_check
          %p300 = pneg %p70
        $region14: #{tpu_custom_call.1} parent=11 // pred_check_branch
          %302 = sbr.rel (%p300) target = $region16
        $region15: #{tpu_custom_call.1} parent=11 // pred_region
          _
        $region16: #{tpu_custom_call.1} parent=11 // pred_fallthru
          _
        // Predicated region
        $region17: #{tpu_custom_call.1} parent=11 // pred_check
          %p303 = pneg %p91
        $region18: #{tpu_custom_call.1} parent=11 // pred_check_branch
          %305 = sbr.rel (%p303) target = $region20
        $region19: #{tpu_custom_call.1} parent=11 // pred_region
          %307 = vsyncadd [#allocation3], 0
          %s308 = sshll.u32 %s2, 4
          %s309 = int_to_ptr.hbm [resolvable:$true] %s308
          %s310 = sshll.u32 [#allocation2], 4
          %s311 = int_to_ptr.vmem [resolvable:$true] %s310
          %316 = dma.hbm_to_vmem [thread:$0]  %s309, 256, %s311, [#allocation3], 128, 128, 8
        $region20: #{tpu_custom_call.1} parent=11 // pred_fallthru
          _
        // Predicated region
        $region21: #{tpu_custom_call.1} parent=11 // pred_check
          %p317 = pneg %p112
        $region22: #{tpu_custom_call.1} parent=11 // pred_check_branch
          %319 = sbr.rel (%p317) target = $region24
        $region23: #{tpu_custom_call.1} parent=11 // pred_region
          _
        $region24: #{tpu_custom_call.1} parent=11 // pred_fallthru
          _
        // Predicated region
        $region25: #{tpu_custom_call.1} parent=11 // pred_check
          %p320 = pneg %p133
        $region26: #{tpu_custom_call.1} parent=11 // pred_check_branch
          %322 = sbr.rel (%p320) target = $region28
        $region27: #{tpu_custom_call.1} parent=11 // pred_region
          %324 = vsyncadd [#allocation6], 0
          %s325 = sshll.u32 %s4, 4
          %s326 = int_to_ptr.hbm [resolvable:$true] %s325
          %s327 = sshll.u32 [#allocation5], 4
          %s328 = int_to_ptr.vmem [resolvable:$true] %s327
          %333 = dma.hbm_to_vmem [thread:$0]  %s326, 256, %s328, [#allocation6], 128, 128, 8
        $region28: #{tpu_custom_call.1} parent=11 // pred_fallthru
          _
        // Predicated region
        $region29: #{tpu_custom_call.1} parent=11 // pred_check
          %p334 = pneg %p154
        $region30: #{tpu_custom_call.1} parent=11 // pred_check_branch
          %336 = sbr.rel (%p334) target = $region32
        $region31: #{tpu_custom_call.1} parent=11 // pred_region
          _
        $region32: #{tpu_custom_call.1} parent=11 // pred_fallthru
          _
        // Predicated region
        $region33: #{tpu_custom_call.1} parent=11 // pred_check
          %p337 = pneg %p175
        $region34: #{tpu_custom_call.1} parent=11 // pred_check_branch
          %339 = sbr.rel (%p337) target = $region36
        $region35: #{tpu_custom_call.1} parent=11 // pred_region
          _
        $region36: #{tpu_custom_call.1} parent=11 // pred_fallthru
          _
        // Predicated region
        $region37: #{tpu_custom_call.1} parent=11 // pred_check
          %p340 = pneg %p196
        $region38: #{tpu_custom_call.1} parent=11 // pred_check_branch
          %342 = sbr.rel (%p340) target = $region40
        $region39: #{tpu_custom_call.1} parent=11 // pred_region
          %344 = vsyncadd [#allocation6], 0
          %s345 = sshll.u32 %s7, 4
          %s346 = int_to_ptr.hbm [resolvable:$true] %s345
          %s347 = sshll.u32 [#allocation7], 4
          %s348 = int_to_ptr.vmem [resolvable:$true] %s347
          %353 = dma.hbm_to_vmem [thread:$0]  %s346, 512, %s348, [#allocation6], 128, 128, 8
        $region40: #{tpu_custom_call.1} parent=11 // pred_fallthru
          _
        // Predicated region
        $region41: #{tpu_custom_call.1} parent=11 // pred_check
          %p354 = pneg %p217
        $region42: #{tpu_custom_call.1} parent=11 // pred_check_branch
          %356 = sbr.rel (%p354) target = $region44
        $region43: #{tpu_custom_call.1} parent=11 // pred_region
          %358 = vsyncadd [#allocation9], 0
          %s359 = sshll.u32 %s8, 4
          %s360 = int_to_ptr.hbm [resolvable:$true] %s359
          %s361 = sshll.u32 [#allocation8], 4
          %s362 = int_to_ptr.vmem [resolvable:$true] %s361
          %367 = dma.hbm_to_vmem [thread:$0]  %s360, 512, %s362, [#allocation9], 128, 128, 8
        $region44: #{tpu_custom_call.1} parent=11 // pred_fallthru
          _
        // Predicated region
        $region45: #{tpu_custom_call.1} parent=11 // pred_check
          %p368 = pneg %p238
        $region46: #{tpu_custom_call.1} parent=11 // pred_check_branch
          %370 = sbr.rel (%p368) target = $region48
        $region47: #{tpu_custom_call.1} parent=11 // pred_region
          %372 = vsyncadd [#allocation9], 0
          %s373 = sshll.u32 %s9, 4
          %s374 = int_to_ptr.hbm [resolvable:$true] %s373
          %s375 = sshll.u32 [#allocation10], 4
          %s376 = int_to_ptr.vmem [resolvable:$true] %s375
          %381 = dma.hbm_to_vmem [thread:$0]  %s374, 1024, %s376, [#allocation9], 128, 128, 8
        $region48: #{tpu_custom_call.1} parent=11 // pred_fallthru
          _
        // Predicated region
        $region49: #{tpu_custom_call.1} parent=11 // pred_check
          %p382 = pneg %p259
        $region50: #{tpu_custom_call.1} parent=11 // pred_check_branch
          %384 = sbr.rel (%p382) target = $region52
        $region51: #{tpu_custom_call.1} parent=11 // pred_region
          _
        $region52: #{tpu_custom_call.1} parent=11 // pred_fallthru
          _
      $region12: #{tpu_custom_call.1} parent=5 // pred_fallthru
        _
      %p385 = scmp.lt.s32.totalorder %s23, 2
      // Predicated region
      $region53: #{tpu_custom_call.1} parent=5 // pred_check
        %p386 = pneg %p385
      $region54: #{tpu_custom_call.1} parent=5 // pred_check_branch
        %388 = sbr.rel (%p386) target = $region56
      $region55: #{tpu_custom_call.1} parent=5 // pred_region
        // Predicated region
        $region57: #{tpu_custom_call.1} parent=55 // pred_check
          %p389 = pneg %p43
        $region58: #{tpu_custom_call.1} parent=55 // pred_check_branch
          %391 = sbr.rel (%p389) target = $region60
        $region59: #{tpu_custom_call.1} parent=55 // pred_region
          %s392 = smul.u32 2, %s23
          %p393 = scmp.lt.s32.totalorder %s392, 3
          %s394 = scalar_select %p393, %s392, 3
          %s395 = smul.addr %s394, 8
          %s396 = scalar_lea.vmem %s0, %s395
          %s397 = smul.u32 2, %s23
        $region60: #{tpu_custom_call.1} parent=55 // pred_fallthru
          _
      $region56: #{tpu_custom_call.1} parent=5 // pred_fallthru
        _
      %p398 = scmp.le.s32.totalorder 1, %s23
      %p399 = scmp.lt.s32.totalorder %s23, 3
      %p400 = pnand %p398, %p399
      %p401 = pneg %p400
      // Predicated region
      $region61: #{tpu_custom_call.1} parent=5 // pred_check
        _
      $region62: #{tpu_custom_call.1} parent=5 // pred_check_branch
        %403 = sbr.rel (%p400) target = $region64
      $region63: #{tpu_custom_call.1} parent=5 // pred_region
        %s404 = ssub.s32 %s23, 1
        // Predicated region
        $region65: #{tpu_custom_call.1} parent=63 // pred_check
          %p405 = pneg %p91
        $region66: #{tpu_custom_call.1} parent=63 // pred_check_branch
          %407 = sbr.rel (%p405) target = $region68
        $region67: #{tpu_custom_call.1} parent=63 // pred_region
          %409 = dma.done [#allocation3], 256
        $region68: #{tpu_custom_call.1} parent=63 // pred_fallthru
          _
        // Predicated region
        $region69: #{tpu_custom_call.1} parent=63 // pred_check
          %p410 = pneg %p133
        $region70: #{tpu_custom_call.1} parent=63 // pred_check_branch
          %412 = sbr.rel (%p410) target = $region72
        $region71: #{tpu_custom_call.1} parent=63 // pred_region
          %414 = dma.done [#allocation6], 256
        $region72: #{tpu_custom_call.1} parent=63 // pred_fallthru
          _
        // Predicated region
        $region73: #{tpu_custom_call.1} parent=63 // pred_check
          %p415 = pneg %p196
        $region74: #{tpu_custom_call.1} parent=63 // pred_check_branch
          %417 = sbr.rel (%p415) target = $region76
        $region75: #{tpu_custom_call.1} parent=63 // pred_region
          %419 = dma.done [#allocation6], 512
        $region76: #{tpu_custom_call.1} parent=63 // pred_fallthru
          _
        // Predicated region
        $region77: #{tpu_custom_call.1} parent=63 // pred_check
          %p420 = pneg %p217
        $region78: #{tpu_custom_call.1} parent=63 // pred_check_branch
          %422 = sbr.rel (%p420) target = $region80
        $region79: #{tpu_custom_call.1} parent=63 // pred_region
          %424 = dma.done [#allocation9], 512
        $region80: #{tpu_custom_call.1} parent=63 // pred_fallthru
          _
        // Predicated region
        $region81: #{tpu_custom_call.1} parent=63 // pred_check
          %p425 = pneg %p238
        $region82: #{tpu_custom_call.1} parent=63 // pred_check_branch
          %427 = sbr.rel (%p425) target = $region84
        $region83: #{tpu_custom_call.1} parent=63 // pred_region
          %429 = dma.done [#allocation9], 1024
        $region84: #{tpu_custom_call.1} parent=63 // pred_fallthru
          _
        %s430 = smul.u32 2, %s28
        %p431 = scmp.lt.s32.totalorder %s430, 3
        %s432 = scalar_select %p431, %s430, 3
        %s433 = smul.addr %s432, 8
        %s434 = scalar_lea.vmem %s0, %s433
        %p435 = pneg %p49
        %p436 = pneg %p46
        %p437 = pneg %p70
        %p438 = pneg %p67
        %p439 = pneg %p91
        %p440 = pneg %p88
        %p441 = pneg %p112
        %p442 = pneg %p109
        %p443 = pneg %p133
        %p444 = pneg %p130
        %p445 = pneg %p154
        %p446 = pneg %p151
        %p447 = pneg %p175
        %p448 = pneg %p172
        %p449 = pneg %p196
        %p450 = pneg %p193
        %p451 = pneg %p217
        %p452 = pneg %p214
        %p453 = pneg %p238
        %p454 = pneg %p235
        %p455 = pneg %p259
        %p456 = pneg %p256
        %p457 = pneg %p285
        %p458 = pneg %p282
        %s459 = sand.u32 %s272, 1
        %s460 = scalar_lea.sflag [#allocation4], %s459
        %s461 = sand.u32 %s272, 1
        %s462 = smul.addr %s461, 16
        %s463 = scalar_lea.vmem [#allocation11], %s462
        %s464 = smul.u32 2, %s28
        %p465 = scmp.lt.s32.totalorder %s464, 3
        %s466 = scalar_select %p465, %s464, 3
        %s467 = smul.addr %s466, 8
        %s468 = scalar_lea.vmem %s0, %s467
        %s469 = smul.u32 2, %s28
        %s470 = smul.u32 2, %s28
        %v471 = vld [vmem:[%s1] sm:$0xff]
        %v472 = vld [vmem:[%s1 + $0x8] sm:$0xff]
        %v473 = vld [vmem:[%s1 + $0x10] sm:$0xff]
        %v474 = vld [vmem:[%s1 + $0x18] sm:$0xff]
        %v475 = vld [vmem:[%s1 + $0x20] sm:$0xff]
        %v476 = vld [vmem:[%s1 + $0x28] sm:$0xff]
        %v477 = vld [vmem:[%s1 + $0x30] sm:$0xff]
        %v478 = vld [vmem:[%s1 + $0x38] sm:$0xff]
        %v479 = vld [vmem:[#allocation2] sm:$0xff]
        %v480 = vld [vmem:[#allocation2 + $0x8] sm:$0xff]
        %v481 = vld [vmem:[#allocation5] sm:$0xff]
        %v482 = vld [vmem:[#allocation5 + $0x8] sm:$0xff]
        %v483 = vld [vmem:[%s6] sm:$0xff]
        %v484 = vld [vmem:[%s6 + $0x8] sm:$0xff]
        %v485 = vld [vmem:[%s6 + $0x10] sm:$0xff]
        %v486 = vld [vmem:[%s6 + $0x18] sm:$0xff]
        %v487 = vld [vmem:[%s6 + $0x20] sm:$0xff]
        %v488 = vld [vmem:[%s6 + $0x28] sm:$0xff]
        %v489 = vld [vmem:[%s6 + $0x30] sm:$0xff]
        %v490 = vld [vmem:[%s6 + $0x38] sm:$0xff]
        %v491 = vld [vmem:[#allocation7] sm:$0xff]
        %v492 = vld [vmem:[#allocation7 + $0x8] sm:$0xff]
        %v493 = vld [vmem:[#allocation7 + $0x10] sm:$0xff]
        %v494 = vld [vmem:[#allocation7 + $0x18] sm:$0xff]
        %v495 = vld [vmem:[#allocation8] sm:$0xff]
        %v496 = vld [vmem:[#allocation8 + $0x8] sm:$0xff]
        %v497 = vld [vmem:[#allocation8 + $0x10] sm:$0xff]
        %v498 = vld [vmem:[#allocation8 + $0x18] sm:$0xff]
        %v499 = vld [vmem:[#allocation10] sm:$0xff]
        %v500 = vld [vmem:[#allocation10 + $0x8] sm:$0xff]
        %v501 = vld [vmem:[#allocation10 + $0x10] sm:$0xff]
        %v502 = vld [vmem:[#allocation10 + $0x18] sm:$0xff]
        %v503 = vld [vmem:[#allocation10 + $0x20] sm:$0xff]
        %v504 = vld [vmem:[#allocation10 + $0x28] sm:$0xff]
        %v505 = vld [vmem:[#allocation10 + $0x30] sm:$0xff]
        %v506 = vld [vmem:[#allocation10 + $0x38] sm:$0xff]
        %v507 = vld [vmem:[%s3] sm:$0x1]
        %v509 = vperm.slane %v507, 0
        %v511 = vld [vmem:[%s5] sm:$0xff]
        %v512 = vld [vmem:[%s5 + $0x8] sm:$0xff]
        %v513 = vld [vmem:[%s5 + $0x10] sm:$0xff]
        %v514 = vld [vmem:[%s5 + $0x18] sm:$0xff]
        %516 = vset.pattern.permute.xlu0 0
        %517 = vperm.xlu0 %516, %v511
        %v518 = vpop.permute.xlu0 %517
        %521 = vset.pattern.permute.xlu0 0
        %522 = vperm.xlu0 %521, %v512
        %v523 = vpop.permute.xlu0 %522
        %526 = vset.pattern.permute.xlu0 0
        %527 = vperm.xlu0 %526, %v513
        %v528 = vpop.permute.xlu0 %527
        %531 = vset.pattern.permute.xlu0 0
        %532 = vperm.xlu0 %531, %v514
        %v533 = vpop.permute.xlu0 %532
        %v535 = vld [vmem:[%s10] sm:$0x1]
        %v537 = vperm.slane %v535, 0
        %v539 = vld [vmem:[%s468] sm:$0xff]
        %v540 = vld [vmem:[%s468 + $0x8] sm:$0xff]
        %vm541 = vcmask 261120
        %v543 = vsel %vm541, %v539, 0
        %v546 = vsel %vm541, %v540, 0
        %548 = vmatpush.msra.mxu0 0.0
        %549 = vmatpush.msra.mxu0 0.0
        %550 = vmatpush.msra.mxu0 0.0
        %551 = vmatpush.msra.mxu0 0.0
        %552 = vmatpush.msra.mxu0 0.0
        %553 = vmatpush.msra.mxu0 0.0
        %554 = vmatpush.msra.mxu0 0.0
        %555 = vmatpush.msra.mxu0 0.0
        %556 = vmatpush.msra.mxu0 0.0
        %557 = vmatpush.msra.mxu0 0.0
        %558 = vmatpush.msra.mxu0 0.0
        %559 = vmatpush.msra.mxu0 0.0
        %560 = vmatpush.msra.mxu0 %v477
        %561 = vmatpush.msra.mxu0 %v475
        %562 = vmatpush.msra.mxu0 %v473
        %563 = vmatpush.msra.mxu0 %v471
        %564 = vmatmul.f32.gmra.mxu0 %v543
        %v565 = vpop.f32.mrf.mxu0
        %v566 = vadd.f32 0.0, %v565
        %567 = vmatmul.f32.gmra.mxu0 %v546
        %v568 = vpop.f32.mrf.mxu0
        %v569 = vadd.f32 0.0, %v568
        %570 = vdwg.mxu0
        %571 = vmatpush.msra.mxu0 0.0
        %572 = vmatpush.msra.mxu0 0.0
        %573 = vmatpush.msra.mxu0 0.0
        %574 = vmatpush.msra.mxu0 0.0
        %575 = vmatpush.msra.mxu0 0.0
        %576 = vmatpush.msra.mxu0 0.0
        %577 = vmatpush.msra.mxu0 0.0
        %578 = vmatpush.msra.mxu0 0.0
        %579 = vmatpush.msra.mxu0 0.0
        %580 = vmatpush.msra.mxu0 0.0
        %581 = vmatpush.msra.mxu0 0.0
        %582 = vmatpush.msra.mxu0 0.0
        %583 = vmatpush.msra.mxu0 %v478
        %584 = vmatpush.msra.mxu0 %v476
        %585 = vmatpush.msra.mxu0 %v474
        %586 = vmatpush.msra.mxu0 %v472
        %587 = vmatmul.f32.gmra.mxu0 %v543
        %v588 = vpop.f32.mrf.mxu0
        %v589 = vadd.f32 0.0, %v588
        %590 = vmatmul.f32.gmra.mxu0 %v546
        %v591 = vpop.f32.mrf.mxu0
        %v592 = vadd.f32 0.0, %v591
        %593 = vdwg.mxu0
        %596 = vrot.lane.b32.xlu0 %v566, 64
        %v597 = vpop.permute.xlu0 %596
        %598 = vrot.lane.b32.xlu0 %v569, 64
        %v599 = vpop.permute.xlu0 %598
        %602 = vxpose.xlu0.b32.start [1/16] %v597, 128
        %603 = vxpose.xlu0.b32.cont [2/16] %v599, 128
        %604 = vxpose.xlu0.b32.cont [3/16] 0.0, 128
        %605 = vxpose.xlu0.b32.cont [4/16] 0.0, 128
        %606 = vxpose.xlu0.b32.cont [5/16] 0.0, 128
        %607 = vxpose.xlu0.b32.cont [6/16] 0.0, 128
        %608 = vxpose.xlu0.b32.cont [7/16] 0.0, 128
        %609 = vxpose.xlu0.b32.cont [8/16] 0.0, 128
        %610 = vxpose.xlu0.b32.cont [9/16] 0.0, 128
        %611 = vxpose.xlu0.b32.cont [10/16] 0.0, 128
        %612 = vxpose.xlu0.b32.cont [11/16] 0.0, 128
        %613 = vxpose.xlu0.b32.cont [12/16] 0.0, 128
        %614 = vxpose.xlu0.b32.cont [13/16] 0.0, 128
        %615 = vxpose.xlu0.b32.cont [14/16] 0.0, 128
        %616 = vxpose.xlu0.b32.cont [15/16] 0.0, 128
        %617 = vxpose.xlu0.b32.end [16/16] 0.0, 128
        %v618 = vpop.trf.xlu0
        %v619 = vpop.trf.xlu0
        %v620 = vpop.trf.xlu0
        %v621 = vpop.trf.xlu0
        %v622 = vpop.trf.xlu0
        %v623 = vpop.trf.xlu0
        %v624 = vpop.trf.xlu0
        %v625 = vpop.trf.xlu0
        %v626 = vpop.trf.xlu0
        %v627 = vpop.trf.xlu0
        %v628 = vpop.trf.xlu0
        %v629 = vpop.trf.xlu0
        %v630 = vpop.trf.xlu0
        %v631 = vpop.trf.xlu0
        %v632 = vpop.trf.xlu0
        %v633 = vpop.trf.xlu0
        %vm634 = vcmask 130048
        %v636 = vsel %vm634, %v618, 0
        %v639 = vsel %vm634, %v619, 0
        %v642 = vsel %vm634, %v620, 0
        %v645 = vsel %vm634, %v621, 0
        %v648 = vsel %vm634, %v622, 0
        %v651 = vsel %vm634, %v623, 0
        %v654 = vsel %vm634, %v624, 0
        %v657 = vsel %vm634, %v625, 0
        %659 = vmatpush.msra.mxu0 0.0
        %660 = vmatpush.msra.mxu0 0.0
        %661 = vmatpush.msra.mxu0 0.0
        %662 = vmatpush.msra.mxu0 0.0
        %663 = vmatpush.msra.mxu0 0.0
        %664 = vmatpush.msra.mxu0 0.0
        %665 = vmatpush.msra.mxu0 0.0
        %666 = vmatpush.msra.mxu0 0.0
        %667 = vmatpush.msra.mxu0 0.0
        %668 = vmatpush.msra.mxu0 0.0
        %669 = vmatpush.msra.mxu0 0.0
        %670 = vmatpush.msra.mxu0 0.0
        %671 = vmatpush.msra.mxu0 0.0
        %672 = vmatpush.msra.mxu0 0.0
        %673 = vmatpush.msra.mxu0 %v480
        %674 = vmatpush.msra.mxu0 %v479
        %675 = vmatmul.f32.gmra.mxu0 %v636
        %v676 = vpop.f32.mrf.mxu0
        %v677 = vadd.f32 %v509, %v676
        %678 = vmatmul.f32.gmra.mxu0 %v639
        %v679 = vpop.f32.mrf.mxu0
        %v680 = vadd.f32 %v509, %v679
        %681 = vmatmul.f32.gmra.mxu0 %v642
        %v682 = vpop.f32.mrf.mxu0
        %v683 = vadd.f32 %v509, %v682
        %684 = vmatmul.f32.gmra.mxu0 %v645
        %v685 = vpop.f32.mrf.mxu0
        %v686 = vadd.f32 %v509, %v685
        %687 = vmatmul.f32.gmra.mxu0 %v648
        %v688 = vpop.f32.mrf.mxu0
        %v689 = vadd.f32 %v509, %v688
        %690 = vmatmul.f32.gmra.mxu0 %v651
        %v691 = vpop.f32.mrf.mxu0
        %v692 = vadd.f32 %v509, %v691
        %693 = vmatmul.f32.gmra.mxu0 %v654
        %v694 = vpop.f32.mrf.mxu0
        %v695 = vadd.f32 %v509, %v694
        %696 = vmatmul.f32.gmra.mxu0 %v657
        %v697 = vpop.f32.mrf.mxu0
        %v698 = vadd.f32 %v509, %v697
        %699 = vdwg.mxu0
        %v700 = vmul.f32 %v677, %v483
        %v701 = vmul.f32 %v680, %v484
        %v702 = vmul.f32 %v683, %v485
        %v703 = vmul.f32 %v686, %v486
        %v704 = vmul.f32 %v689, %v487
        %v705 = vmul.f32 %v692, %v488
        %v706 = vmul.f32 %v695, %v489
        %v707 = vmul.f32 %v698, %v490
        %708 = vxpose.xlu0.b32.start [1/16] %v481, 128
        %709 = vxpose.xlu0.b32.cont [2/16] %v482, 128
        %710 = vxpose.xlu0.b32.cont [3/16] 0.0, 128
        %711 = vxpose.xlu0.b32.cont [4/16] 0.0, 128
        %712 = vxpose.xlu0.b32.cont [5/16] 0.0, 128
        %713 = vxpose.xlu0.b32.cont [6/16] 0.0, 128
        %714 = vxpose.xlu0.b32.cont [7/16] 0.0, 128
        %715 = vxpose.xlu0.b32.cont [8/16] 0.0, 128
        %716 = vxpose.xlu0.b32.cont [9/16] 0.0, 128
        %717 = vxpose.xlu0.b32.cont [10/16] 0.0, 128
        %718 = vxpose.xlu0.b32.cont [11/16] 0.0, 128
        %719 = vxpose.xlu0.b32.cont [12/16] 0.0, 128
        %720 = vxpose.xlu0.b32.cont [13/16] 0.0, 128
        %721 = vxpose.xlu0.b32.cont [14/16] 0.0, 128
        %722 = vxpose.xlu0.b32.cont [15/16] 0.0, 128
        %723 = vxpose.xlu0.b32.end [16/16] 0.0, 128
        %v724 = vpop.trf.xlu0
        %v725 = vpop.trf.xlu0
        %v726 = vpop.trf.xlu0
        %v727 = vpop.trf.xlu0
        %v728 = vpop.trf.xlu0
        %v729 = vpop.trf.xlu0
        %v730 = vpop.trf.xlu0
        %v731 = vpop.trf.xlu0
        %v732 = vpop.trf.xlu0
        %v733 = vpop.trf.xlu0
        %v734 = vpop.trf.xlu0
        %v735 = vpop.trf.xlu0
        %v736 = vpop.trf.xlu0
        %v737 = vpop.trf.xlu0
        %v738 = vpop.trf.xlu0
        %v739 = vpop.trf.xlu0
        %v741 = vsel %vm634, %v724, 0
        %v744 = vsel %vm634, %v725, 0
        %v747 = vsel %vm634, %v726, 0
        %v750 = vsel %vm634, %v727, 0
        %752 = vmatpush.msra.mxu0 0.0
        %753 = vmatpush.msra.mxu0 0.0
        %754 = vmatpush.msra.mxu0 0.0
        %755 = vmatpush.msra.mxu0 0.0
        %756 = vmatpush.msra.mxu0 0.0
        %757 = vmatpush.msra.mxu0 0.0
        %758 = vmatpush.msra.mxu0 0.0
        %759 = vmatpush.msra.mxu0 0.0
        %760 = vmatpush.msra.mxu0 0.0
        %761 = vmatpush.msra.mxu0 0.0
        %762 = vmatpush.msra.mxu0 0.0
        %763 = vmatpush.msra.mxu0 0.0
        %764 = vmatpush.msra.mxu0 0.0
        %765 = vmatpush.msra.mxu0 0.0
        %766 = vmatpush.msra.mxu0 %v592
        %767 = vmatpush.msra.mxu0 %v589
        %768 = vmatmul.f32.gmra.mxu0 %v741
        %v769 = vpop.f32.mrf.mxu0
        %v770 = vadd.f32 %v518, %v769
        %771 = vmatmul.f32.gmra.mxu0 %v744
        %v772 = vpop.f32.mrf.mxu0
        %v773 = vadd.f32 %v523, %v772
        %774 = vmatmul.f32.gmra.mxu0 %v747
        %v775 = vpop.f32.mrf.mxu0
        %v776 = vadd.f32 %v528, %v775
        %777 = vmatmul.f32.gmra.mxu0 %v750
        %v778 = vpop.f32.mrf.mxu0
        %v779 = vadd.f32 %v533, %v778
        %780 = vdwg.mxu0
        %v781 = vmul.f32 %v770, %v491
        %v782 = vmul.f32 %v773, %v492
        %v783 = vmul.f32 %v776, %v493
        %v784 = vmul.f32 %v779, %v494
        %vm785 = vcmask 523264
        %v786 = vsel %vm785, %v566, 0
        %v788 = vsel %vm785, %v569, 0
        %790 = vmatpush.msra.mxu0 0.0
        %791 = vmatpush.msra.mxu0 0.0
        %792 = vmatpush.msra.mxu0 0.0
        %793 = vmatpush.msra.mxu0 0.0
        %794 = vmatpush.msra.mxu0 0.0
        %795 = vmatpush.msra.mxu0 0.0
        %796 = vmatpush.msra.mxu0 0.0
        %797 = vmatpush.msra.mxu0 0.0
        %798 = vmatpush.msra.mxu0 %v707
        %799 = vmatpush.msra.mxu0 %v706
        %800 = vmatpush.msra.mxu0 %v705
        %801 = vmatpush.msra.mxu0 %v704
        %802 = vmatpush.msra.mxu0 %v703
        %803 = vmatpush.msra.mxu0 %v702
        %804 = vmatpush.msra.mxu0 %v701
        %805 = vmatpush.msra.mxu0 %v700
        %806 = vmatmul.f32.gmra.mxu0 %v786
        %v807 = vpop.f32.mrf.mxu0
        %v808 = vadd.f32 0.0, %v807
        %809 = vmatmul.f32.gmra.mxu0 %v788
        %v810 = vpop.f32.mrf.mxu0
        %v811 = vadd.f32 0.0, %v810
        %812 = vdwg.mxu0
        %v813 = vsel %vm541, %v808, -inf
        %814 = vmax.xlane.f32.xlu0 %v813
        %v815 = vpop.xlane.xlu0 %814
        %v816 = vsel %vm541, %v811, -inf
        %817 = vmax.xlane.f32.xlu0 %v816
        %v818 = vpop.xlane.xlu0 %817
        %v819 = vsub.f32 %v808, %v815
        %v820 = vsub.f32 %v811, %v818
        %v821 = vmul.f32 %v819, 1.442695
        %v822 = vpow.pop %v821
        %v823 = vmul.f32 %v820, 1.442695
        %v824 = vpow.pop %v823
        %v826 = vsel %vm541, %v822, 0
        %v829 = vsel %vm541, %v824, 0
        %831 = vmatpush.msra.mxu0 0.0
        %832 = vmatpush.msra.mxu0 0.0
        %833 = vmatpush.msra.mxu0 0.0
        %834 = vmatpush.msra.mxu0 0.0
        %835 = vmatpush.msra.mxu0 0.0
        %836 = vmatpush.msra.mxu0 0.0
        %837 = vmatpush.msra.mxu0 0.0
        %838 = vmatpush.msra.mxu0 0.0
        %839 = vmatpush.msra.mxu0 0.0
        %840 = vmatpush.msra.mxu0 0.0
        %841 = vmatpush.msra.mxu0 0.0
        %842 = vmatpush.msra.mxu0 0.0
        %843 = vmatpush.msra.mxu0 %v498
        %844 = vmatpush.msra.mxu0 %v497
        %845 = vmatpush.msra.mxu0 %v496
        %846 = vmatpush.msra.mxu0 %v495
        %847 = vmatmul.f32.gmra.mxu0 %v826
        %v848 = vpop.f32.mrf.mxu0
        %v849 = vadd.f32 0.0, %v848
        %850 = vmatmul.f32.gmra.mxu0 %v829
        %v851 = vpop.f32.mrf.mxu0
        %v852 = vadd.f32 0.0, %v851
        %853 = vdwg.mxu0
        %v854 = vrcp.pop %v849
        %v855 = vrcp.pop %v852
        %v856 = vmul.f32 %v822, %v854
        %v857 = vmul.f32 %v824, %v855
        %v859 = vsel %vm541, %v856, 0
        %v862 = vsel %vm541, %v857, 0
        %864 = vmatpush.msra.mxu0 0.0
        %865 = vmatpush.msra.mxu0 0.0
        %866 = vmatpush.msra.mxu0 0.0
        %867 = vmatpush.msra.mxu0 0.0
        %868 = vmatpush.msra.mxu0 0.0
        %869 = vmatpush.msra.mxu0 0.0
        %870 = vmatpush.msra.mxu0 0.0
        %871 = vmatpush.msra.mxu0 0.0
        %872 = vmatpush.msra.mxu0 0.0
        %873 = vmatpush.msra.mxu0 0.0
        %874 = vmatpush.msra.mxu0 0.0
        %875 = vmatpush.msra.mxu0 0.0
        %876 = vmatpush.msra.mxu0 %v784
        %877 = vmatpush.msra.mxu0 %v783
        %878 = vmatpush.msra.mxu0 %v782
        %879 = vmatpush.msra.mxu0 %v781
        %880 = vmatmul.f32.gmra.mxu0 %v859
        %v881 = vpop.f32.mrf.mxu0
        %v882 = vadd.f32 0.0, %v881
        %883 = vmatmul.f32.gmra.mxu0 %v862
        %v884 = vpop.f32.mrf.mxu0
        %v885 = vadd.f32 0.0, %v884
        %886 = vdwg.mxu0
        %v888 = vsel %vm785, %v882, 0
        %v891 = vsel %vm785, %v885, 0
        %893 = vmatpush.msra.mxu0 0.0
        %894 = vmatpush.msra.mxu0 0.0
        %895 = vmatpush.msra.mxu0 0.0
        %896 = vmatpush.msra.mxu0 0.0
        %897 = vmatpush.msra.mxu0 0.0
        %898 = vmatpush.msra.mxu0 0.0
        %899 = vmatpush.msra.mxu0 0.0
        %900 = vmatpush.msra.mxu0 0.0
        %901 = vmatpush.msra.mxu0 %v506
        %902 = vmatpush.msra.mxu0 %v505
        %903 = vmatpush.msra.mxu0 %v504
        %904 = vmatpush.msra.mxu0 %v503
        %905 = vmatpush.msra.mxu0 %v502
        %906 = vmatpush.msra.mxu0 %v501
        %907 = vmatpush.msra.mxu0 %v500
        %908 = vmatpush.msra.mxu0 %v499
        %909 = vmatmul.f32.gmra.mxu0 %v888
        %v910 = vpop.f32.mrf.mxu0
        %v911 = vadd.f32 %v537, %v910
        %912 = vmatmul.f32.gmra.mxu0 %v891
        %v913 = vpop.f32.mrf.mxu0
        %v914 = vadd.f32 %v537, %v913
        %915 = vdwg.mxu0
        %916 = vst [vmem:[%s463] sm:$0xff] %v911
        %917 = vst [vmem:[%s463 + $0x8] sm:$0xff] %v914
        %s918 = sand.u32 %s272, 1
        %s919 = scalar_lea.sflag [#allocation4], %s918
        %s920 = sand.u32 %s272, 1
        %s921 = smul.addr %s920, 16
        %s922 = scalar_lea.vmem [#allocation11], %s921
        // Predicated region
        $region85: #{tpu_custom_call.1} parent=63 // pred_check
          %p923 = pneg %p282
        $region86: #{tpu_custom_call.1} parent=63 // pred_check_branch
          %925 = sbr.rel (%p923) target = $region88
        $region87: #{tpu_custom_call.1} parent=63 // pred_region
          %s926 = smul.u32 2, %s28
          %928 = vsyncadd %s919, 0
          %s929 = smul.addr %s926, 8
          %s930 = scalar_lea.hbm %s11, %s929
          %s931 = sshll.u32 %s922, 4
          %s932 = int_to_ptr.vmem [resolvable:$true] %s931
          %s933 = sshll.u32 %s930, 4
          %s934 = int_to_ptr.hbm [resolvable:$true] %s933
          %939 = dma.vmem_to_hbm [thread:$0]  %s932, 256, %s934, %s919, 128, 128, 8
        $region88: #{tpu_custom_call.1} parent=63 // pred_fallthru
          _
      $region64: #{tpu_custom_call.1} parent=5 // pred_fallthru
        _
      %p940 = scmp.le.s32.totalorder 2, %s23
      // Predicated region
      $region89: #{tpu_custom_call.1} parent=5 // pred_check
        %p941 = pneg %p940
      $region90: #{tpu_custom_call.1} parent=5 // pred_check_branch
        %943 = sbr.rel (%p941) target = $region92
      $region91: #{tpu_custom_call.1} parent=5 // pred_region
        %s944 = ssub.s32 %s23, 2
        // Predicated region
        $region93: #{tpu_custom_call.1} parent=91 // pred_check
          %p945 = pneg %p288
        $region94: #{tpu_custom_call.1} parent=91 // pred_check_branch
          %947 = sbr.rel (%p945) target = $region96
        $region95: #{tpu_custom_call.1} parent=91 // pred_region
          %s948 = sand.u32 %s273, 1
          %s949 = scalar_lea.sflag [#allocation4], %s948
          %s950 = sand.u32 %s273, 1
          %s951 = smul.addr %s950, 16
          %s952 = scalar_lea.vmem [#allocation11], %s951
          %954 = dma.done %s949, 256
        $region96: #{tpu_custom_call.1} parent=91 // pred_fallthru
          _
      $region92: #{tpu_custom_call.1} parent=5 // pred_fallthru
        _
    $region6: #{tpu_custom_call.1} parent=1 // loop_footer
      %s27 = sadd.s32 1, %s23
    $region7: #{tpu_custom_call.1} parent=1 // loop_footer_branch
      %22 = sbr.rel target = $region3
    $region8: #{tpu_custom_call.1} parent=1 // loop_exit
      _
    %955 = vsyncpa [#allocation3], 1
    %s956 = scalar_lea.sflag [#allocation3], 1
    %957 = vsyncpa %s956, 1
    %958 = vsyncpa [#allocation6], 1
    %959 = vsyncpa [#allocation9], 1
    %960 = vsyncpa [#allocation4], 1
    %s961 = scalar_lea.sflag [#allocation4], 1
    %962 = vsyncpa %s961, 1

</llo_original>
